<compile_context>
chip_gen: v6e
topology: v6e:2x2x1
jax: 0.10.0
libtpu: 0.0.40
codegen_flags: <defaults>
</compile_context>

<pallas_src>
import functools

import jax
import jax.numpy as jnp
from jax import lax
from jax.experimental import pallas as pl
from jax.experimental.pallas import tpu as pltpu


def _blif_kernel(a_ref, x_ref, s_ref, *, thresh, chunk_lanes):
    """One grid step: (T, tn) lane tile of x -> (T, tn) spikes.

    a_ref : (1, tn) f32  per-lane decay a = exp(-exp(A_log[channel-of-lane]))
    x_ref : (T, tn)      input tile (any float dtype; upcast in-register)
    s_ref : (T, tn)      output spikes

    v[t] = sum_{tau<=t} a^(t-tau) x[tau] is computed with a doubling scan over
    the (small) time axis: log2(T) steps of sublane roll + masked multiply-add.
    """
    T = x_ref.shape[0]
    tn = x_ref.shape[1]
    n_chunks = tn // chunk_lanes

    # Hoisted once per grid step (JAX does not CSE broadcast_in_dim).
    row_idx = lax.broadcasted_iota(jnp.int32, (T, chunk_lanes), 0)

    @pl.loop(0, n_chunks)
    def _(j):
        off = j * chunk_lanes
        if chunk_lanes % 128 == 0:
            off = pl.multiple_of(off, 128)

        v = x_ref[:, pl.ds(off, chunk_lanes)].astype(jnp.float32)   # (T, cl)
        p = a_ref[:, pl.ds(off, chunk_lanes)]                       # (1, cl)

        # Weighted prefix sum over time (Hillis-Steele doubling scan): after
        # offsets d = 1, 2, 4, ... the causal window covers all tau <= t.
        d = 1
        while d < T:                                   # static: log2(T) iters
            shifted = pltpu.roll(v, shift=d, axis=0)   # shifted[t] = v[t-d]
            v = v + jnp.where(row_idx >= d, shifted * p, 0.0)
            p = p * p                                  # a^d -> a^(2d)
            d *= 2

        # spike(v - thresh) == (v > thresh).float()
        s = (v > thresh).astype(jnp.float32)
        # s[1:] *= (1 - s[:-1]) using the ORIGINAL s (no sequential cascade).
        s_prev = jnp.where(row_idx == 0, 0.0, pltpu.roll(s, shift=1, axis=0))
        out = s * (1.0 - s_prev)

        s_ref[:, pl.ds(off, chunk_lanes)] = out.astype(s_ref.dtype)


def _vmem_capacity_bytes():
    try:
        return int(pltpu.get_tpu_info().vmem_capacity_bytes)
    except Exception:
        return 64 * 1024 * 1024      # conservative fallback (v7x per-TC VMEM)


def blif_forward(x, A_log, thresh=1.0, out_dtype=jnp.float32):
    """x: (T,B,C,H,W) float; A_log: (C,) float32 -> spikes (T,B,C,H,W).

    out_dtype defaults to float32 for drop-in parity with the PyTorch module;
    pass jnp.bfloat16 to halve the HBM write stream (lossless: spikes are {0,1}).
    """
    T, B, C, H, W = x.shape
    M = B * C * H * W
    x_bytes = jnp.dtype(x.dtype).itemsize
    out_bytes = jnp.dtype(out_dtype).itemsize

    # Per-lane decay vector (extra HBM read of M*4 bytes, amortized over T rows).
    decay = jnp.exp(-jnp.exp(A_log.reshape(C).astype(jnp.float32)))        # (C,)
    a_lane = jnp.broadcast_to(decay[None, :, None, None],
                              (B, C, H, W)).reshape(1, M)

    # Free reshape, NO astype: the kernel upcasts in-register, so a bf16/f16 x
    # is streamed as-is instead of being copied to f32 in HBM first.
    xf = x.reshape(T, M)

    # ---- generation-aware tile sizing (mem-bound kernel: multi-MiB blocks).
    vmem_cap = _vmem_capacity_bytes()
    budget = int(vmem_cap * 0.40)                    # headroom for compiler scratch
    per_lane = 2 * (T * (x_bytes + out_bytes) + 4)   # double-buffered x, s, a_lane

    if M % 128 != 0:
        # Lane-ragged fallback: single full-width block (fine for small M).
        # TODO(synk): chunk internally for very large M not a multiple of 128.
        cl = tn = M
    else:
        # Inner chunk: ~8 vregs per (T, cl) f32 array keeps live ranges small.
        cl = min(M, max(128, ((8192 // T) // 128) * 128))
        budget_lanes = max(cl, budget // per_lane)
        tn = max(cl, (min(M, budget_lanes) // cl) * cl)
        if tn == M and M % (2 * cl) == 0 and M >= 2 * cl:
            tn = M // 2     # keep >= 2 grid steps so 'parallel' can use both TCs
    grid_n = pl.cdiv(M, tn)

    kernel = functools.partial(_blif_kernel, thresh=float(thresh),
                               chunk_lanes=cl)

    s = pl.pallas_call(
        kernel,
        out_shape=jax.ShapeDtypeStruct((T, M), out_dtype),
        grid=(grid_n,),
        in_specs=[
            pl.BlockSpec((1, tn), lambda i: (0, i)),   # per-lane decay
            pl.BlockSpec((T, tn), lambda i: (0, i)),   # x lane tile
        ],
        out_specs=pl.BlockSpec((T, tn), lambda i: (0, i)),
        compiler_params=pltpu.CompilerParams(
            dimension_semantics=("parallel",),
            vmem_limit_bytes=int(vmem_cap * 0.85),
        ),
        cost_estimate=pl.CostEstimate(
            flops=15 * T * M,
            transcendentals=0,
            bytes_accessed=T * M * (x_bytes + out_bytes) + 4 * M),
    )(a_lane, xf)

    # Free reshape back to the module's output layout.
    return s.reshape(T, B, C, H, W)


def blif_reference(x, A_log, thresh=1.0):
    """Pure-JAX reference mirroring the PyTorch FFT-conv forward. Returns (s, v)."""
    T = x.shape[0]
    neg_rate = -jnp.exp(A_log.astype(jnp.float32))                          # (C,)
    t = jnp.arange(T, dtype=jnp.float32)
    diff = t[:, None] - t[None, :]                                          # (T,T)
    K = jnp.where(diff >= 0.0,
                  jnp.exp(neg_rate[:, None, None] * jnp.maximum(diff, 0.0)[None]),
                  0.0)                                                      # (C,T,T)
    v = jnp.einsum('ctu,ubchw->tbchw', K, x.astype(jnp.float32))
    s = (v > thresh).astype(jnp.float32)
    s = s.at[1:].set(s[1:] * (1.0 - s[:-1]))
    return s, v


if __name__ == "__main__":
    # Small shapes: T=8 time steps, batch=2, channels=4, spatial 16x16.
    T, B, C, H, W = 8, 2, 4, 16, 16
    r_min, r_max = 0.4, 0.9
    thresh = 1.0

    key = jax.random.PRNGKey(0)
    k_u, k_x = jax.random.split(key)

    # Deterministic parameter init mirroring init_recurrent():
    #   A_log = log(-0.5 * log(u * (r_max^2 - r_min^2) + r_min^2)),  u ~ U[0,1)
    u = jax.random.uniform(k_u, (C,), dtype=jnp.float32)
    A_log = jnp.log(-0.5 * jnp.log(u * (r_max ** 2 - r_min ** 2) + r_min ** 2))

    x = jax.random.normal(k_x, (T, B, C, H, W), dtype=jnp.float32)

    s = jax.block_until_ready(blif_forward(x, A_log, thresh=thresh))
    s_ref, v_ref = blif_reference(x, A_log, thresh=thresh)
    s_ref = jax.block_until_ready(s_ref)

    assert s.shape == (T, B, C, H, W) and s.dtype == jnp.float32

    # Spike bits are only well-defined where v is not within a few ulp of the
    # threshold (different f32 summation orders may legally disagree there);
    # a flipped bit at t-1 also propagates one step through the refractory term.
    amb = jnp.abs(v_ref - thresh) <= 1e-5
    amb = amb.at[1:].set(amb[1:] | amb[:-1])
    match = jnp.where(amb, True, s == s_ref)
    assert bool(jnp.all(match)), "mismatch vs reference"
    print("KERNEL_OK")
</pallas_src>

<mosaic_0001>
module attributes {stable_mosaic.version = 11 : i64} {
  func.func @_blif_kernel(%arg0: i32, %arg1: memref<1x1024xf32, #tpu.memory_space<vmem>>, %arg2: memref<8x1024xf32, #tpu.memory_space<vmem>>, %arg3: memref<8x1024xf32, #tpu.memory_space<vmem>>) attributes {dimension_semantics = [#tpu.dimension_semantics<parallel>], iteration_bounds = array<i64: 2>, scalar_prefetch = 0 : i64, scratch_operands = 0 : i64, tpu.core_type = #tpu.core_type<tc>, window_params = [{transform_indices = @transform_0, window_bounds = array<i64: 1, 1024>}, {transform_indices = @transform_1, window_bounds = array<i64: 8, 1024>}, {transform_indices = @transform_2, window_bounds = array<i64: 8, 1024>}]} {
    %0 = tpu.iota {dimensions = array<i32: 0>} : vector<8x1024xi32>
    %c0_i32 = arith.constant 0 : i32
    %c1_i32 = arith.constant 1 : i32
    %1 = arith.muli %c0_i32, %c1_i32 : i32
    %c0_i32_0 = arith.constant 0 : i32
    %2 = arith.addi %c0_i32_0, %1 : i32
    %c1024_i32 = arith.constant 1024 : i32
    %3 = arith.muli %2, %c1024_i32 : i32
    %4 = tpu.assume_multiple %3, 128 : i32
    %c0 = arith.constant 0 : index
    %5 = arith.index_cast %4 : i32 to index
    %6 = vector.load %arg2[%c0, %5] : memref<8x1024xf32, #tpu.memory_space<vmem>>, vector<8x1024xf32>
    %c0_1 = arith.constant 0 : index
    %7 = arith.index_cast %4 : i32 to index
    %8 = vector.load %arg1[%c0_1, %7] : memref<1x1024xf32, #tpu.memory_space<vmem>>, vector<1x1024xf32>
    %c1_i32_2 = arith.constant 1 : i32
    %9 = tpu.dynamic_rotate %6 by %c1_i32_2 dim 0 : vector<8x1024xf32>, i32 -> vector<8x1024xf32>
    %c1_i32_3 = arith.constant 1 : i32
    %10 = vector.broadcast %c1_i32_3 : i32 to vector<8x1024xi32>
    %11 = arith.cmpi sge, %0, %10 : vector<8x1024xi32>
    %12 = vector.broadcast %8 : vector<1x1024xf32> to vector<8x1024xf32>
    %13 = arith.mulf %9, %12 : vector<8x1024xf32>
    %cst = arith.constant 0.000000e+00 : f32
    %14 = vector.broadcast %cst : f32 to vector<8x1024xf32>
    %15 = arith.select %11, %13, %14 : vector<8x1024xi1>, vector<8x1024xf32>
    %16 = arith.addf %6, %15 : vector<8x1024xf32>
    %17 = arith.mulf %8, %8 : vector<1x1024xf32>
    %c2_i32 = arith.constant 2 : i32
    %18 = tpu.dynamic_rotate %16 by %c2_i32 dim 0 : vector<8x1024xf32>, i32 -> vector<8x1024xf32>
    %c2_i32_4 = arith.constant 2 : i32
    %19 = vector.broadcast %c2_i32_4 : i32 to vector<8x1024xi32>
    %20 = arith.cmpi sge, %0, %19 : vector<8x1024xi32>
    %21 = vector.broadcast %17 : vector<1x1024xf32> to vector<8x1024xf32>
    %22 = arith.mulf %18, %21 : vector<8x1024xf32>
    %cst_5 = arith.constant 0.000000e+00 : f32
    %23 = vector.broadcast %cst_5 : f32 to vector<8x1024xf32>
    %24 = arith.select %20, %22, %23 : vector<8x1024xi1>, vector<8x1024xf32>
    %25 = arith.addf %16, %24 : vector<8x1024xf32>
    %26 = arith.mulf %17, %17 : vector<1x1024xf32>
    %c4_i32 = arith.constant 4 : i32
    %27 = tpu.dynamic_rotate %25 by %c4_i32 dim 0 : vector<8x1024xf32>, i32 -> vector<8x1024xf32>
    %c4_i32_6 = arith.constant 4 : i32
    %28 = vector.broadcast %c4_i32_6 : i32 to vector<8x1024xi32>
    %29 = arith.cmpi sge, %0, %28 : vector<8x1024xi32>
    %30 = vector.broadcast %26 : vector<1x1024xf32> to vector<8x1024xf32>
    %31 = arith.mulf %27, %30 : vector<8x1024xf32>
    %cst_7 = arith.constant 0.000000e+00 : f32
    %32 = vector.broadcast %cst_7 : f32 to vector<8x1024xf32>
    %33 = arith.select %29, %31, %32 : vector<8x1024xi1>, vector<8x1024xf32>
    %34 = arith.addf %25, %33 : vector<8x1024xf32>
    %cst_8 = arith.constant 1.000000e+00 : f32
    %35 = vector.broadcast %cst_8 : f32 to vector<8x1024xf32>
    %36 = arith.cmpf ogt, %34, %35 : vector<8x1024xf32>
    %37 = arith.extui %36 : vector<8x1024xi1> to vector<8x1024xi32>
    %38 = arith.sitofp %37 : vector<8x1024xi32> to vector<8x1024xf32>
    %c0_i32_9 = arith.constant 0 : i32
    %39 = vector.broadcast %c0_i32_9 : i32 to vector<8x1024xi32>
    %40 = arith.cmpi eq, %0, %39 : vector<8x1024xi32>
    %c1_i32_10 = arith.constant 1 : i32
    %41 = tpu.dynamic_rotate %38 by %c1_i32_10 dim 0 : vector<8x1024xf32>, i32 -> vector<8x1024xf32>
    %cst_11 = arith.constant 0.000000e+00 : f32
    %42 = vector.broadcast %cst_11 : f32 to vector<8x1024xf32>
    %43 = arith.select %40, %42, %41 : vector<8x1024xi1>, vector<8x1024xf32>
    %cst_12 = arith.constant 1.000000e+00 : f32
    %44 = vector.broadcast %cst_12 : f32 to vector<8x1024xf32>
    %45 = arith.subf %44, %43 : vector<8x1024xf32>
    %46 = arith.mulf %38, %45 : vector<8x1024xf32>
    %c0_13 = arith.constant 0 : index
    %47 = arith.index_cast %4 : i32 to index
    %48 = vector.load %arg3[%c0_13, %47] : memref<8x1024xf32, #tpu.memory_space<vmem>>, vector<8x1024xf32>
    tpu.vector_store %arg3[%c0_13, %47], %46 {strides = array<i32>} : memref<8x1024xf32, #tpu.memory_space<vmem>>, vector<8x1024xf32>,
    %c1_i32_14 = arith.constant 1 : i32
    return
  }
  func.func @transform_0(%arg0: i32) -> (i32, i32) {
    %c0_i32 = arith.constant 0 : i32
    %c0_i32_0 = arith.constant 0 : i32
    return %c0_i32, %arg0 : i32, i32
  }
  func.func @transform_1(%arg0: i32) -> (i32, i32) {
    %c0_i32 = arith.constant 0 : i32
    %c0_i32_0 = arith.constant 0 : i32
    return %c0_i32, %arg0 : i32, i32
  }
  func.func @transform_2(%arg0: i32) -> (i32, i32) {
    %c0_i32 = arith.constant 0 : i32
    %c0_i32_0 = arith.constant 0 : i32
    return %c0_i32, %arg0 : i32, i32
  }
}

</mosaic_0001>

<llo_original>
// kernel: tpu_custom_call.1
$region0: #{tpu_custom_call.1}
  #allocation0 [shape = 'u32[]', space=smem, size = 0x4, offset = 0x4, fixed_abs, tag = 'smem constant byte address 0x4 - core index']
  #allocation1 [shape = 'u32[144,128]{1,0:T(1,128)}', space=vmem, size = 0x12000, scoped, tag = 'internal scratch']
  %s0 = inlined_call_operand.hbm [shape: f32[1,2048], index: 0, kind: input, shape index: {}]
  %s1 = inlined_call_operand.hbm [shape: f32[8,2048], index: 1, kind: input, shape index: {}]
  %s2 = inlined_call_operand.hbm [shape: f32[8,2048], index: 2, kind: output, shape index: {}]
  %s3 = sld [smem:[#allocation0]]
  $region49: #{tpu_custom_call.1} parent=0
    _
  %s5 = ssub.s32 1, %s3
  %s6 = scalar_select 0, %s5, %s3
  $region1: #{tpu_custom_call.1} parent=0
    #allocation2 [shape = 'u8[8192]{0}', space=vmem, size = 0x2000, scoped, tag = 'input window, operand 0']
    #allocation3 [shape = 's32[2]{0}', space=sflag, size = 0x8, scoped, tag = 'scoped memory for tpu_custom_call.1']
    #allocation4 [shape = 's32[2]{0}', space=sflag, size = 0x8, scoped, tag = 'scoped memory for tpu_custom_call.1']
    #allocation5 [shape = 'u8[65536]{0}', space=vmem, size = 0x10000, scoped, tag = 'input window, operand 1']
    #allocation6 [shape = 's32[2]{0}', space=sflag, size = 0x8, scoped, tag = 'scoped memory for tpu_custom_call.1']
    #allocation7 [shape = 'u8[65536]{0}', space=vmem, size = 0x10000, scoped, tag = 'output window, operand 0']
    %7 = vsyncpa [#allocation3], 0
    %s8 = scalar_lea.sflag [#allocation3], 1
    %9 = vsyncpa %s8, 0
    %10 = vsyncpa [#allocation6], 0
    %s11 = scalar_lea.sflag [#allocation6], 1
    %12 = vsyncpa %s11, 0
    %13 = vsyncpa [#allocation4], 0
    %s14 = scalar_lea.sflag [#allocation4], 1
    %15 = vsyncpa %s14, 0
    loop: start=0, step=1, limit=4
    $region2: #{tpu_custom_call.1} parent=1 // loop_pre_header
      _
    $region3: #{tpu_custom_call.1} parent=1 // loop_header
      %s17 = sphi 0, %s21
      %p18 = scmp.ge.s32.totalorder %s17, 4
      %s27 = sphi 0, %s29
      %s30 = sphi 0, %s27
      %s31 = sphi 0, %s30
      %s47 = sphi 0, %s31
      %s53 = sphi 0, %s55
      %s56 = sphi 0, %s53
      %s57 = sphi 0, %s56
      %s73 = sphi 0, %s57
      %s79 = sphi 0, %s81
      %s82 = sphi 0, %s79
      %s83 = sphi 0, %s82
      %s99 = sphi 0, %s83
    $region4: #{tpu_custom_call.1} parent=1 // loop_header_branch
      %20 = sbr.rel (%p18) target = $region8
    $region5: #{tpu_custom_call.1} parent=1 // loop_body
      %s22 = ssub.s32 %s17, 1
      %s23 = ssub.s32 %s17, 2
      %s24 = sadd.s32 %s17, 1
      %s25 = ssub.s32 %s17, %s24
      %p26 = scmp.eq.s32.totalorder %s25, 0
      %s28 = sadd.s32 %s27, 1
      %s29 = scalar_select %p26, %s27, %s28
      %p32 = pneg %p26
      %p33 = scmp.eq.s32.totalorder %s17, 1
      %p34 = por %p32, %p33
      %p35 = scmp.ne.s32.totalorder %s27, %s30
      %p36 = scmp.eq.s32.totalorder %s17, 0
      %p37 = por %p35, %p36
      %p38 = scmp.ne.s32.totalorder %s27, %s30
      %p39 = scmp.eq.s32.totalorder %s22, 1
      %p40 = por %p38, %p39
      %p41 = scmp.ne.s32.totalorder %s30, %s31
      %p42 = scmp.eq.s32.totalorder %s22, 0
      %p43 = por %p41, %p42
      %p44 = scmp.ne.s32.totalorder %s30, %s31
      %p45 = scmp.eq.s32.totalorder %s23, 1
      %p46 = por %p44, %p45
      %p48 = scmp.ne.s32.totalorder %s31, %s47
      %p49 = scmp.eq.s32.totalorder %s23, 0
      %p50 = por %p48, %p49
      %s51 = ssub.s32 %s17, %s24
      %p52 = scmp.eq.s32.totalorder %s51, 0
      %s54 = sadd.s32 %s53, 1
      %s55 = scalar_select %p52, %s53, %s54
      %p58 = pneg %p52
      %p59 = scmp.eq.s32.totalorder %s17, 1
      %p60 = por %p58, %p59
      %p61 = scmp.ne.s32.totalorder %s53, %s56
      %p62 = scmp.eq.s32.totalorder %s17, 0
      %p63 = por %p61, %p62
      %p64 = scmp.ne.s32.totalorder %s53, %s56
      %p65 = scmp.eq.s32.totalorder %s22, 1
      %p66 = por %p64, %p65
      %p67 = scmp.ne.s32.totalorder %s56, %s57
      %p68 = scmp.eq.s32.totalorder %s22, 0
      %p69 = por %p67, %p68
      %p70 = scmp.ne.s32.totalorder %s56, %s57
      %p71 = scmp.eq.s32.totalorder %s23, 1
      %p72 = por %p70, %p71
      %p74 = scmp.ne.s32.totalorder %s57, %s73
      %p75 = scmp.eq.s32.totalorder %s23, 0
      %p76 = por %p74, %p75
      %s77 = ssub.s32 %s17, %s24
      %p78 = scmp.eq.s32.totalorder %s77, 0
      %s80 = sadd.s32 %s79, 1
      %s81 = scalar_select %p78, %s79, %s80
      %p84 = pneg %p78
      %p85 = scmp.eq.s32.totalorder %s17, 1
      %p86 = por %p84, %p85
      %p87 = scmp.ne.s32.totalorder %s79, %s82
      %p88 = scmp.eq.s32.totalorder %s17, 0
      %p89 = por %p87, %p88
      %p90 = scmp.ne.s32.totalorder %s79, %s82
      %p91 = scmp.eq.s32.totalorder %s22, 1
      %p92 = por %p90, %p91
      %p93 = scmp.ne.s32.totalorder %s82, %s83
      %p94 = scmp.eq.s32.totalorder %s22, 0
      %p95 = por %p93, %p94
      %p96 = scmp.ne.s32.totalorder %s82, %s83
      %p97 = scmp.eq.s32.totalorder %s23, 1
      %p98 = por %p96, %p97
      %p100 = scmp.ne.s32.totalorder %s83, %s99
      %p101 = scmp.eq.s32.totalorder %s23, 0
      %p102 = por %p100, %p101
      %p103 = scmp.le.s32.totalorder 1, %s17
      %p104 = scmp.lt.s32.totalorder %s17, 3
      %p105 = pnand %p103, %p104
      %p106 = pneg %p105
      // Predicated region
      $region9: #{tpu_custom_call.1} parent=5 // pred_check
        _
      $region10: #{tpu_custom_call.1} parent=5 // pred_check_branch
        %108 = sbr.rel (%p105) target = $region12
      $region11: #{tpu_custom_call.1} parent=5 // pred_region
        %s109 = ssub.s32 %s17, 1
      $region12: #{tpu_custom_call.1} parent=5 // pred_fallthru
        _
      %p110 = scmp.lt.s32.totalorder %s17, 2
      // Predicated region
      $region13: #{tpu_custom_call.1} parent=5 // pred_check
        %p111 = pneg %p110
      $region14: #{tpu_custom_call.1} parent=5 // pred_check_branch
        %113 = sbr.rel (%p111) target = $region16
      $region15: #{tpu_custom_call.1} parent=5 // pred_region
        // Predicated region
        $region17: #{tpu_custom_call.1} parent=15 // pred_check
          %p114 = pneg %p37
        $region18: #{tpu_custom_call.1} parent=15 // pred_check_branch
          %116 = sbr.rel (%p114) target = $region20
        $region19: #{tpu_custom_call.1} parent=15 // pred_region
          %s117 = sand.u32 %s27, 1
          %s118 = scalar_lea.sflag [#allocation3], %s117
          %s119 = sand.u32 %s27, 1
          %s120 = smul.addr %s119, 8
          %s121 = scalar_lea.vmem [#allocation2], %s120
          %s122 = smul.u32 8, %s17
          %s124 = ssub.s32 128, 128
          %125 = vsyncadd %s118, %s124
          %s126 = smul.addr %s122, 16
          %s127 = scalar_lea.hbm %s0, %s126
          %s129 = sshll.u32 %s121, 4
          %s130 = int_to_ptr.vmem [resolvable:$true] %s129
          %132 = dma.hbm_to_vmem [thread:$0]  %s127, 128, %s130, %s118
        $region20: #{tpu_custom_call.1} parent=15 // pred_fallthru
          _
        // Predicated region
        $region21: #{tpu_custom_call.1} parent=15 // pred_check
          %p133 = pneg %p63
        $region22: #{tpu_custom_call.1} parent=15 // pred_check_branch
          %135 = sbr.rel (%p133) target = $region24
        $region23: #{tpu_custom_call.1} parent=15 // pred_region
          %s136 = sand.u32 %s53, 1
          %s137 = scalar_lea.sflag [#allocation6], %s136
          %s138 = sand.u32 %s53, 1
          %s139 = smul.addr %s138, 64
          %s140 = scalar_lea.vmem [#allocation5], %s139
          %s141 = smul.u32 8, %s17
          %s143 = ssub.s32 1024, 1024
          %144 = vsyncadd %s137, %s143
          %s145 = smul.addr %s141, 128
          %s146 = scalar_lea.hbm %s1, %s145
          %s148 = sshll.u32 %s140, 4
          %s149 = int_to_ptr.vmem [resolvable:$true] %s148
          %151 = dma.hbm_to_vmem [thread:$0]  %s146, 1024, %s149, %s137
        $region24: #{tpu_custom_call.1} parent=15 // pred_fallthru
          _
      $region16: #{tpu_custom_call.1} parent=5 // pred_fallthru
        _
      %p152 = scmp.le.s32.totalorder 1, %s17
      %p153 = scmp.lt.s32.totalorder %s17, 3
      %p154 = pnand %p152, %p153
      %p155 = pneg %p154
      // Predicated region
      $region25: #{tpu_custom_call.1} parent=5 // pred_check
        _
      $region26: #{tpu_custom_call.1} parent=5 // pred_check_branch
        %157 = sbr.rel (%p154) target = $region28
      $region27: #{tpu_custom_call.1} parent=5 // pred_region
        %s158 = ssub.s32 %s17, 1
        %s159 = sand.u32 %s30, 1
        %s160 = scalar_lea.sflag [#allocation3], %s159
        %s161 = sand.u32 %s30, 1
        %s162 = smul.addr %s161, 8
        %s163 = scalar_lea.vmem [#allocation2], %s162
        // Predicated region
        $region29: #{tpu_custom_call.1} parent=27 // pred_check
          %p164 = pneg %p43
        $region30: #{tpu_custom_call.1} parent=27 // pred_check_branch
          %166 = sbr.rel (%p164) target = $region32
        $region31: #{tpu_custom_call.1} parent=27 // pred_region
          %167 = dma.done %s160, 128
        $region32: #{tpu_custom_call.1} parent=27 // pred_fallthru
          _
        %s168 = sand.u32 %s56, 1
        %s169 = scalar_lea.sflag [#allocation6], %s168
        %s170 = sand.u32 %s56, 1
        %s171 = smul.addr %s170, 64
        %s172 = scalar_lea.vmem [#allocation5], %s171
        // Predicated region
        $region33: #{tpu_custom_call.1} parent=27 // pred_check
          %p173 = pneg %p69
        $region34: #{tpu_custom_call.1} parent=27 // pred_check_branch
          %175 = sbr.rel (%p173) target = $region36
        $region35: #{tpu_custom_call.1} parent=27 // pred_region
          %176 = dma.done %s169, 1024
        $region36: #{tpu_custom_call.1} parent=27 // pred_fallthru
          _
        %s177 = sand.u32 %s30, 1
        %s178 = scalar_lea.sflag [#allocation3], %s177
        %s179 = sand.u32 %s30, 1
        %s180 = smul.addr %s179, 8
        %s181 = scalar_lea.vmem [#allocation2], %s180
        %p182 = pneg %p43
        %p183 = pneg %p40
        %s184 = sand.u32 %s56, 1
        %s185 = scalar_lea.sflag [#allocation6], %s184
        %s186 = sand.u32 %s56, 1
        %s187 = smul.addr %s186, 64
        %s188 = scalar_lea.vmem [#allocation5], %s187
        %p189 = pneg %p69
        %p190 = pneg %p66
        %p191 = pneg %p95
        %p192 = pneg %p92
        %s193 = sand.u32 %s82, 1
        %s194 = scalar_lea.sflag [#allocation4], %s193
        %s195 = sand.u32 %s82, 1
        %s196 = smul.addr %s195, 64
        %s197 = scalar_lea.vmem [#allocation7], %s196
        %s198 = smul.u32 8, %s22
        %s199 = smul.u32 8, %s22
        %s200 = smul.u32 8, %s22
        %v201 = vlaneseq
        %v202 = vshrl.u32 %v201, 7
        %v203 = vld [vmem:[%s172] sm:$0xff]
        %v204 = vld [vmem:[%s172 + $0x8] sm:$0xff]
        %v205 = vld [vmem:[%s172 + $0x10] sm:$0xff]
        %v206 = vld [vmem:[%s172 + $0x18] sm:$0xff]
        %v207 = vld [vmem:[%s172 + $0x20] sm:$0xff]
        %v208 = vld [vmem:[%s172 + $0x28] sm:$0xff]
        %v209 = vld [vmem:[%s172 + $0x30] sm:$0xff]
        %v210 = vld [vmem:[%s172 + $0x38] sm:$0xff]
        %v211 = vld [vmem:[%s163] sm:$0xff]
        %v212 = vrot.slane %v203, 7
        %v213 = vrot.slane %v204, 7
        %v214 = vrot.slane %v205, 7
        %v215 = vrot.slane %v206, 7
        %v216 = vrot.slane %v207, 7
        %v217 = vrot.slane %v208, 7
        %v218 = vrot.slane %v209, 7
        %v219 = vrot.slane %v210, 7
        %vm220 = vcmp.ge.s32.totalorder %v202, 1
        %v222 = vlaneseq
        %v223 = vshrl.u32 %v222, 7
        %v224 = vsub.s32 0, %v223
        %v225 = vrot.slane %v211, %v224
        %v226 = vlaneseq
        %v227 = vshrl.u32 %v226, 7
        %v228 = vsub.s32 1, %v227
        %v229 = vrot.slane %v211, %v228
        %v230 = vlaneseq
        %v231 = vshrl.u32 %v230, 7
        %v232 = vsub.s32 2, %v231
        %v233 = vrot.slane %v211, %v232
        %v234 = vlaneseq
        %v235 = vshrl.u32 %v234, 7
        %v236 = vsub.s32 3, %v235
        %v237 = vrot.slane %v211, %v236
        %v238 = vlaneseq
        %v239 = vshrl.u32 %v238, 7
        %v240 = vsub.s32 4, %v239
        %v241 = vrot.slane %v211, %v240
        %v242 = vlaneseq
        %v243 = vshrl.u32 %v242, 7
        %v244 = vsub.s32 5, %v243
        %v245 = vrot.slane %v211, %v244
        %v246 = vlaneseq
        %v247 = vshrl.u32 %v246, 7
        %v248 = vsub.s32 6, %v247
        %v249 = vrot.slane %v211, %v248
        %v250 = vlaneseq
        %v251 = vshrl.u32 %v250, 7
        %v252 = vsub.s32 7, %v251
        %v253 = vrot.slane %v211, %v252
        %v262 = vmul.f32 %v212, %v225
        %v263 = vmul.f32 %v213, %v229
        %v264 = vmul.f32 %v214, %v233
        %v265 = vmul.f32 %v215, %v237
        %v266 = vmul.f32 %v216, %v241
        %v267 = vmul.f32 %v217, %v245
        %v268 = vmul.f32 %v218, %v249
        %v269 = vmul.f32 %v219, %v253
        %v270 = vsel %vm220, %v262, 0.0
        %v271 = vsel %vm220, %v263, 0.0
        %v272 = vsel %vm220, %v264, 0.0
        %v273 = vsel %vm220, %v265, 0.0
        %v274 = vsel %vm220, %v266, 0.0
        %v275 = vsel %vm220, %v267, 0.0
        %v276 = vsel %vm220, %v268, 0.0
        %v277 = vsel %vm220, %v269, 0.0
        %v278 = vadd.f32 %v203, %v270
        %v279 = vadd.f32 %v204, %v271
        %v280 = vadd.f32 %v205, %v272
        %v281 = vadd.f32 %v206, %v273
        %v282 = vadd.f32 %v207, %v274
        %v283 = vadd.f32 %v208, %v275
        %v284 = vadd.f32 %v209, %v276
        %v285 = vadd.f32 %v210, %v277
        %v286 = vmul.f32 %v211, %v211
        %v287 = vrot.slane %v278, 6
        %v288 = vrot.slane %v279, 6
        %v289 = vrot.slane %v280, 6
        %v290 = vrot.slane %v281, 6
        %v291 = vrot.slane %v282, 6
        %v292 = vrot.slane %v283, 6
        %v293 = vrot.slane %v284, 6
        %v294 = vrot.slane %v285, 6
        %vm295 = vcmp.ge.s32.totalorder %v202, 2
        %v297 = vlaneseq
        %v298 = vshrl.u32 %v297, 7
        %v299 = vsub.s32 0, %v298
        %v300 = vrot.slane %v286, %v299
        %v301 = vlaneseq
        %v302 = vshrl.u32 %v301, 7
        %v303 = vsub.s32 1, %v302
        %v304 = vrot.slane %v286, %v303
        %v305 = vlaneseq
        %v306 = vshrl.u32 %v305, 7
        %v307 = vsub.s32 2, %v306
        %v308 = vrot.slane %v286, %v307
        %v309 = vlaneseq
        %v310 = vshrl.u32 %v309, 7
        %v311 = vsub.s32 3, %v310
        %v312 = vrot.slane %v286, %v311
        %v313 = vlaneseq
        %v314 = vshrl.u32 %v313, 7
        %v315 = vsub.s32 4, %v314
        %v316 = vrot.slane %v286, %v315
        %v317 = vlaneseq
        %v318 = vshrl.u32 %v317, 7
        %v319 = vsub.s32 5, %v318
        %v320 = vrot.slane %v286, %v319
        %v321 = vlaneseq
        %v322 = vshrl.u32 %v321, 7
        %v323 = vsub.s32 6, %v322
        %v324 = vrot.slane %v286, %v323
        %v325 = vlaneseq
        %v326 = vshrl.u32 %v325, 7
        %v327 = vsub.s32 7, %v326
        %v328 = vrot.slane %v286, %v327
        %v337 = vmul.f32 %v287, %v300
        %v338 = vmul.f32 %v288, %v304
        %v339 = vmul.f32 %v289, %v308
        %v340 = vmul.f32 %v290, %v312
        %v341 = vmul.f32 %v291, %v316
        %v342 = vmul.f32 %v292, %v320
        %v343 = vmul.f32 %v293, %v324
        %v344 = vmul.f32 %v294, %v328
        %v345 = vsel %vm295, %v337, 0.0
        %v346 = vsel %vm295, %v338, 0.0
        %v347 = vsel %vm295, %v339, 0.0
        %v348 = vsel %vm295, %v340, 0.0
        %v349 = vsel %vm295, %v341, 0.0
        %v350 = vsel %vm295, %v342, 0.0
        %v351 = vsel %vm295, %v343, 0.0
        %v352 = vsel %vm295, %v344, 0.0
        %v353 = vadd.f32 %v278, %v345
        %v354 = vadd.f32 %v279, %v346
        %v355 = vadd.f32 %v280, %v347
        %v356 = vadd.f32 %v281, %v348
        %v357 = vadd.f32 %v282, %v349
        %v358 = vadd.f32 %v283, %v350
        %v359 = vadd.f32 %v284, %v351
        %v360 = vadd.f32 %v285, %v352
        %v361 = vmul.f32 %v286, %v286
        %v362 = vrot.slane %v353, 4
        %v363 = vrot.slane %v354, 4
        %v364 = vrot.slane %v355, 4
        %v365 = vrot.slane %v356, 4
        %v366 = vrot.slane %v357, 4
        %v367 = vrot.slane %v358, 4
        %v368 = vrot.slane %v359, 4
        %v369 = vrot.slane %v360, 4
        %vm370 = vcmp.ge.s32.totalorder %v202, 4
        %v372 = vlaneseq
        %v373 = vshrl.u32 %v372, 7
        %v374 = vsub.s32 0, %v373
        %v375 = vrot.slane %v361, %v374
        %v376 = vlaneseq
        %v377 = vshrl.u32 %v376, 7
        %v378 = vsub.s32 1, %v377
        %v379 = vrot.slane %v361, %v378
        %v380 = vlaneseq
        %v381 = vshrl.u32 %v380, 7
        %v382 = vsub.s32 2, %v381
        %v383 = vrot.slane %v361, %v382
        %v384 = vlaneseq
        %v385 = vshrl.u32 %v384, 7
        %v386 = vsub.s32 3, %v385
        %v387 = vrot.slane %v361, %v386
        %v388 = vlaneseq
        %v389 = vshrl.u32 %v388, 7
        %v390 = vsub.s32 4, %v389
        %v391 = vrot.slane %v361, %v390
        %v392 = vlaneseq
        %v393 = vshrl.u32 %v392, 7
        %v394 = vsub.s32 5, %v393
        %v395 = vrot.slane %v361, %v394
        %v396 = vlaneseq
        %v397 = vshrl.u32 %v396, 7
        %v398 = vsub.s32 6, %v397
        %v399 = vrot.slane %v361, %v398
        %v400 = vlaneseq
        %v401 = vshrl.u32 %v400, 7
        %v402 = vsub.s32 7, %v401
        %v403 = vrot.slane %v361, %v402
        %v412 = vmul.f32 %v362, %v375
        %v413 = vmul.f32 %v363, %v379
        %v414 = vmul.f32 %v364, %v383
        %v415 = vmul.f32 %v365, %v387
        %v416 = vmul.f32 %v366, %v391
        %v417 = vmul.f32 %v367, %v395
        %v418 = vmul.f32 %v368, %v399
        %v419 = vmul.f32 %v369, %v403
        %v420 = vsel %vm370, %v412, 0.0
        %v421 = vsel %vm370, %v413, 0.0
        %v422 = vsel %vm370, %v414, 0.0
        %v423 = vsel %vm370, %v415, 0.0
        %v424 = vsel %vm370, %v416, 0.0
        %v425 = vsel %vm370, %v417, 0.0
        %v426 = vsel %vm370, %v418, 0.0
        %v427 = vsel %vm370, %v419, 0.0
        %v428 = vadd.f32 %v353, %v420
        %v429 = vadd.f32 %v354, %v421
        %v430 = vadd.f32 %v355, %v422
        %v431 = vadd.f32 %v356, %v423
        %v432 = vadd.f32 %v357, %v424
        %v433 = vadd.f32 %v358, %v425
        %v434 = vadd.f32 %v359, %v426
        %v435 = vadd.f32 %v360, %v427
        %vm436 = vcmp.gt.f32.partialorder %v428, 1.0
        %vm437 = vcmp.gt.f32.partialorder %v429, 1.0
        %vm438 = vcmp.gt.f32.partialorder %v430, 1.0
        %vm439 = vcmp.gt.f32.partialorder %v431, 1.0
        %vm440 = vcmp.gt.f32.partialorder %v432, 1.0
        %vm441 = vcmp.gt.f32.partialorder %v433, 1.0
        %vm442 = vcmp.gt.f32.partialorder %v434, 1.0
        %vm443 = vcmp.gt.f32.partialorder %v435, 1.0
        %v444 = vsel %vm436, 1, 0
        %v445 = vsel %vm437, 1, 0
        %v446 = vsel %vm438, 1, 0
        %v447 = vsel %vm439, 1, 0
        %v448 = vsel %vm440, 1, 0
        %v449 = vsel %vm441, 1, 0
        %v450 = vsel %vm442, 1, 0
        %v451 = vsel %vm443, 1, 0
        %v452 = vcvt.s32.f32 %v444
        %v453 = vcvt.s32.f32 %v445
        %v454 = vcvt.s32.f32 %v446
        %v455 = vcvt.s32.f32 %v447
        %v456 = vcvt.s32.f32 %v448
        %v457 = vcvt.s32.f32 %v449
        %v458 = vcvt.s32.f32 %v450
        %v459 = vcvt.s32.f32 %v451
        %vm460 = vcmp.eq.s32.totalorder %v202, 0
        %v461 = vrot.slane %v452, 7
        %v462 = vrot.slane %v453, 7
        %v463 = vrot.slane %v454, 7
        %v464 = vrot.slane %v455, 7
        %v465 = vrot.slane %v456, 7
        %v466 = vrot.slane %v457, 7
        %v467 = vrot.slane %v458, 7
        %v468 = vrot.slane %v459, 7
        %v469 = vsel %vm460, 0.0, %v461
        %v470 = vsel %vm460, 0.0, %v462
        %v471 = vsel %vm460, 0.0, %v463
        %v472 = vsel %vm460, 0.0, %v464
        %v473 = vsel %vm460, 0.0, %v465
        %v474 = vsel %vm460, 0.0, %v466
        %v475 = vsel %vm460, 0.0, %v467
        %v476 = vsel %vm460, 0.0, %v468
        %v477 = vsub.f32 1.0, %v469
        %v478 = vsub.f32 1.0, %v470
        %v479 = vsub.f32 1.0, %v471
        %v480 = vsub.f32 1.0, %v472
        %v481 = vsub.f32 1.0, %v473
        %v482 = vsub.f32 1.0, %v474
        %v483 = vsub.f32 1.0, %v475
        %v484 = vsub.f32 1.0, %v476
        %v485 = vmul.f32 %v452, %v477
        %v486 = vmul.f32 %v453, %v478
        %v487 = vmul.f32 %v454, %v479
        %v488 = vmul.f32 %v455, %v480
        %v489 = vmul.f32 %v456, %v481
        %v490 = vmul.f32 %v457, %v482
        %v491 = vmul.f32 %v458, %v483
        %v492 = vmul.f32 %v459, %v484
        %493 = vst [vmem:[%s197] sm:$0xff] %v485
        %494 = vst [vmem:[%s197 + $0x8] sm:$0xff] %v486
        %495 = vst [vmem:[%s197 + $0x10] sm:$0xff] %v487
        %496 = vst [vmem:[%s197 + $0x18] sm:$0xff] %v488
        %497 = vst [vmem:[%s197 + $0x20] sm:$0xff] %v489
        %498 = vst [vmem:[%s197 + $0x28] sm:$0xff] %v490
        %499 = vst [vmem:[%s197 + $0x30] sm:$0xff] %v491
        %500 = vst [vmem:[%s197 + $0x38] sm:$0xff] %v492
        %s501 = sand.u32 %s82, 1
        %s502 = scalar_lea.sflag [#allocation4], %s501
        %s503 = sand.u32 %s82, 1
        %s504 = smul.addr %s503, 64
        %s505 = scalar_lea.vmem [#allocation7], %s504
        // Predicated region
        $region37: #{tpu_custom_call.1} parent=27 // pred_check
          %p506 = pneg %p92
        $region38: #{tpu_custom_call.1} parent=27 // pred_check_branch
          %508 = sbr.rel (%p506) target = $region40
        $region39: #{tpu_custom_call.1} parent=27 // pred_region
          %s509 = smul.u32 8, %s22
          %s511 = ssub.s32 1024, 1024
          %512 = vsyncadd %s502, %s511
          %s513 = smul.addr %s509, 128
          %s514 = scalar_lea.hbm %s2, %s513
          %s516 = sshll.u32 %s505, 4
          %s517 = int_to_ptr.vmem [resolvable:$true] %s516
          %519 = dma.vmem_to_hbm [thread:$0]  %s517, 1024, %s514, %s502
        $region40: #{tpu_custom_call.1} parent=27 // pred_fallthru
          _
      $region28: #{tpu_custom_call.1} parent=5 // pred_fallthru
        _
      %p520 = scmp.le.s32.totalorder 2, %s17
      // Predicated region
      $region41: #{tpu_custom_call.1} parent=5 // pred_check
        %p521 = pneg %p520
      $region42: #{tpu_custom_call.1} parent=5 // pred_check_branch
        %523 = sbr.rel (%p521) target = $region44
      $region43: #{tpu_custom_call.1} parent=5 // pred_region
        %s524 = ssub.s32 %s17, 2
        // Predicated region
        $region45: #{tpu_custom_call.1} parent=43 // pred_check
          %p525 = pneg %p98
        $region46: #{tpu_custom_call.1} parent=43 // pred_check_branch
          %527 = sbr.rel (%p525) target = $region48
        $region47: #{tpu_custom_call.1} parent=43 // pred_region
          %s528 = sand.u32 %s83, 1
          %s529 = scalar_lea.sflag [#allocation4], %s528
          %s530 = sand.u32 %s83, 1
          %s531 = smul.addr %s530, 64
          %s532 = scalar_lea.vmem [#allocation7], %s531
          %533 = dma.done %s529, 1024
        $region48: #{tpu_custom_call.1} parent=43 // pred_fallthru
          _
      $region44: #{tpu_custom_call.1} parent=5 // pred_fallthru
        _
    $region6: #{tpu_custom_call.1} parent=1 // loop_footer
      %s21 = sadd.s32 1, %s17
    $region7: #{tpu_custom_call.1} parent=1 // loop_footer_branch
      %16 = sbr.rel target = $region3
    $region8: #{tpu_custom_call.1} parent=1 // loop_exit
      _
    %534 = vsyncpa [#allocation3], 1
    %s535 = scalar_lea.sflag [#allocation3], 1
    %536 = vsyncpa %s535, 1
    %537 = vsyncpa [#allocation6], 1
    %s538 = scalar_lea.sflag [#allocation6], 1
    %539 = vsyncpa %s538, 1
    %540 = vsyncpa [#allocation4], 1
    %s541 = scalar_lea.sflag [#allocation4], 1
    %542 = vsyncpa %s541, 1

</llo_original>
